<compile_context>
chip_gen: v7x
topology: tpu7x:2x2x1
jax: 0.10.0
libtpu: 0.0.40
codegen_flags: <defaults>
</compile_context>

<pallas_src>
import functools

import jax
import jax.numpy as jnp
from jax.experimental import pallas as pl
from jax.experimental.pallas import tpu as pltpu

_LANE = 128
_SUBLANE = 8


def _round_up(n, m):
    return ((n + m - 1) // m) * m


def _cdiv(a, b):
    return -(-a // b)


def _pad_to(a, shape):
    pads = [(0, t - s) for s, t in zip(a.shape, shape)]
    return jnp.pad(a, pads)


def _vmem_budget_bytes():
    """~85% of physical VMEM (v5e/v6e 128 MiB -> ~108 MiB, v7x 64 MiB -> ~54 MiB).
    Falls back to the v7x-safe value if the query is unavailable."""
    cap = None
    try:
        info = pltpu.get_tpu_info()
        cap = getattr(info, "vmem_capacity_bytes", None)
    except Exception:
        cap = None
    if not cap:
        cap = 64 * 1024 * 1024
    return int(cap * 0.85)


def _resident_spec(shape):
    """Constant-index, single-buffered (VMEM-resident) operand."""
    return pl.BlockSpec(shape, lambda *_: (0,) * len(shape),
                        pipeline_mode=pl.Buffered(1))


def _mlp_kernel(*refs, n_hidden):
    if n_hidden > 0:
        x_ref, w0_ref, b0_ref, wh_ref, bh_ref, wl_ref, bl_ref, o_ref = refs
    else:
        x_ref, w0_ref, b0_ref, wl_ref, bl_ref, o_ref = refs
        wh_ref = bh_ref = None

    w_dtype = w0_ref.dtype

    # Layer 0: (Wp, 4) @ (4, TB) on the MXU, f32 accumulation.
    # Bias is a (Wp, 1) column broadcast across lanes.
    h = jnp.dot(w0_ref[...], x_ref[...].astype(w_dtype),
                preferred_element_type=jnp.float32)
    h = jnp.maximum(h + b0_ref[...].astype(jnp.float32), 0.0)

    if n_hidden > 0:
        def layer(i, h):
            z = jnp.dot(wh_ref[i], h.astype(w_dtype),
                        preferred_element_type=jnp.float32)
            return jnp.maximum(z + bh_ref[i].astype(jnp.float32), 0.0)

        if n_hidden <= 8:
            # Full unroll: lets the scheduler overlap layer i's bias+ReLU+cast
            # epilogue (VPU) with layer i+1's MXU pushes.
            for i in range(n_hidden):
                h = layer(i, h)
        else:
            # Deep nets: visible, partially-unrolled loop with dynamic
            # first-axis weight indexing.
            h = jax.lax.fori_loop(0, n_hidden, layer, h, unroll=2)

    # Final Linear(W, 1): VPU multiply + cross-sublane (XLU) reduction.
    # Output block is lane-dense (1, TB) -> unmasked stores.
    out = jnp.sum(h * wl_ref[...].astype(jnp.float32), axis=0, keepdims=True)
    o_ref[...] = (out + bl_ref[...].astype(jnp.float32)).astype(o_ref.dtype)


def dnn_forward(x, w0, b0, wh, bh, wl, bl, *, block_b=512,
                compute_dtype=jnp.bfloat16):
    """Forward pass of DNN2.

    x:  (B, 4) float32
    w0: (4, W), b0: (W,)
    wh: (n_hidden, W, W), bh: (n_hidden, W)      (n_hidden = depth - 2, may be 0)
    wl: (W,),  bl: ()                            (final Linear(W, 1))
    Returns (B, 1) float32.

    compute_dtype: dtype of the matmul operands (accumulation is always f32).
    bf16 is the default (native MXU dtype on v5e/v6e/v7x); pass jnp.float32
    for bit-accurate checks.
    """
    # TODO(synk): optional int8 (v6e) / fp8 (v7x) weight path for very wide nets.
    B, f_in = x.shape
    width = w0.shape[1]
    n_hidden = int(wh.shape[0])

    # Lane-dense feature axis.
    w_pad = _round_up(max(width, _LANE), _LANE)

    # Batch tile: lane-dense (multiple of 128), balanced so the last tile is
    # not mostly padding and (when B allows) the grid has an even number >= 2
    # of steps so both v7x TensorCores get work.
    num_tiles = max(2, _cdiv(B, block_b))
    if num_tiles > 2 and num_tiles % 2:
        num_tiles += 1
    tb = max(_round_up(_cdiv(B, num_tiles), _LANE), _LANE)
    b_pad = _round_up(B, tb)
    grid = b_pad // tb

    # Transposed layout: batch on lanes, features on sublanes.
    xp = _pad_to(x.astype(jnp.float32).T, (f_in, b_pad))
    w0p = _pad_to(w0.T, (w_pad, f_in)).astype(compute_dtype)
    b0p = _pad_to(b0.reshape(width, 1), (w_pad, 1)).astype(jnp.float32)
    wlp = _pad_to(wl.reshape(width, 1), (w_pad, 1)).astype(jnp.float32)
    blp = jnp.asarray(bl, jnp.float32).reshape(1, 1)

    args = [xp, w0p, b0p]
    in_specs = [
        pl.BlockSpec((f_in, tb), lambda i: (0, i)),   # activations: tiled over batch
        _resident_spec((w_pad, f_in)),                # weights/biases: resident,
        _resident_spec((w_pad, 1)),                   # single-buffered
    ]
    if n_hidden > 0:
        whp = _pad_to(jnp.swapaxes(wh, 1, 2),
                      (n_hidden, w_pad, w_pad)).astype(compute_dtype)
        bhp = _pad_to(bh.reshape(n_hidden, width, 1),
                      (n_hidden, w_pad, 1)).astype(jnp.float32)
        args += [whp, bhp]
        in_specs += [
            _resident_spec((n_hidden, w_pad, w_pad)),
            _resident_spec((n_hidden, w_pad, 1)),
        ]
    args += [wlp, blp]
    in_specs += [
        _resident_spec((w_pad, 1)),
        _resident_spec((1, 1)),
    ]

    # VMEM budget: single-buffered resident weights + double-buffered x/out
    # tiles + live hidden state (f32 + bf16 copy + slack).
    weight_bytes = sum(int(a.size) * a.dtype.itemsize for a in args[1:])
    act_bytes = (2 * f_in * tb * 4        # x tile, double-buffered
                 + 2 * tb * 4             # out tile, double-buffered
                 + 3 * w_pad * tb * 4)    # hidden-state working set
    cap = _vmem_budget_bytes()
    if weight_bytes + act_bytes > cap:
        # TODO(synk): stream hidden-layer weights per layer (manual
        # double-buffered DMA) instead of keeping the full stack resident
        # when width/depth is huge.
        raise ValueError(
            f"Resident weights + activations ({weight_bytes + act_bytes} bytes) "
            f"exceed the VMEM budget ({cap} bytes); reduce width/depth or add "
            f"per-layer weight streaming.")
    vmem_limit = int(min(cap, max(2 * (weight_bytes + act_bytes),
                                  32 * 1024 * 1024)))

    kernel = functools.partial(_mlp_kernel, n_hidden=n_hidden)

    out = pl.pallas_call(
        kernel,
        out_shape=jax.ShapeDtypeStruct((1, b_pad), jnp.float32),
        grid=(grid,),
        in_specs=in_specs,
        out_specs=pl.BlockSpec((1, tb), lambda i: (0, i)),   # lane-dense store
        compiler_params=pltpu.CompilerParams(
            dimension_semantics=("parallel",),   # batch tiles shard across TCs
            vmem_limit_bytes=vmem_limit,
        ),
    )(*args)
    return out[0, :B].reshape(B, 1)


def init_params(key, depth, width):
    """Deterministic init mimicking PyTorch Linear default (uniform +/- 1/sqrt(fan_in))."""
    ks = jax.random.split(key, 6)

    def uni(k, shape, fan_in):
        bound = 1.0 / jnp.sqrt(fan_in)
        return jax.random.uniform(k, shape, jnp.float32, -bound, bound)

    n_hidden = depth - 2
    w0 = uni(ks[0], (4, width), 4.0)
    b0 = uni(ks[1], (width,), 4.0)
    wh = uni(ks[2], (n_hidden, width, width), float(width))
    bh = uni(ks[3], (n_hidden, width), float(width))
    wl = uni(ks[4], (width,), float(width))
    bl = uni(ks[5], (), float(width))
    return w0, b0, wh, bh, wl, bl


def reference_forward(x, w0, b0, wh, bh, wl, bl):
    h = jnp.maximum(x @ w0 + b0, 0.0)
    for i in range(wh.shape[0]):
        h = jnp.maximum(h @ wh[i] + bh[i], 0.0)
    return (h @ wl)[:, None] + bl


if __name__ == "__main__":
    depth, width, batch = 4, 32, 8
    key = jax.random.PRNGKey(0)
    k_x, k_p = jax.random.split(key)
    x = jax.random.normal(k_x, (batch, 4), jnp.float32)
    params = init_params(k_p, depth, width)

    ref = reference_forward(x, *params)

    # Exact path (f32 operands) — tight tolerance.
    out_f32 = jax.block_until_ready(
        dnn_forward(x, *params, compute_dtype=jnp.float32))
    assert out_f32.shape == (batch, 1)
    assert jnp.allclose(out_f32, ref, atol=1e-4, rtol=1e-5), (
        f"f32 path: max abs err {jnp.max(jnp.abs(out_f32 - ref))}")

    # Default fast path (bf16 operands, f32 accumulation) — loose tolerance.
    out_bf16 = jax.block_until_ready(dnn_forward(x, *params))
    assert out_bf16.shape == (batch, 1)
    assert jnp.allclose(out_bf16, ref, atol=5e-2, rtol=5e-2), (
        f"bf16 path: max abs err {jnp.max(jnp.abs(out_bf16 - ref))}")

    print("KERNEL_OK")
</pallas_src>

<mosaic_0001>
module attributes {stable_mosaic.version = 11 : i64} {
  func.func @_mlp_kernel(%arg0: i32, %arg1: memref<4x128xf32, #tpu.memory_space<vmem>>, %arg2: memref<128x4xf32, #tpu.memory_space<vmem>>, %arg3: memref<128x1xf32, #tpu.memory_space<vmem>>, %arg4: memref<2x128x128xf32, #tpu.memory_space<vmem>>, %arg5: memref<2x128x1xf32, #tpu.memory_space<vmem>>, %arg6: memref<128x1xf32, #tpu.memory_space<vmem>>, %arg7: memref<1x1xf32, #tpu.memory_space<vmem>>, %arg8: memref<1x128xf32, #tpu.memory_space<vmem>>) attributes {dimension_semantics = [#tpu.dimension_semantics<parallel>], iteration_bounds = array<i64: 1>, scalar_prefetch = 0 : i64, scratch_operands = 0 : i64, tpu.core_type = #tpu.core_type<tc>, window_params = [{transform_indices = @transform_0, window_bounds = array<i64: 4, 128>}, {pipeline_mode = #tpu.pipeline_mode<synchronous>, transform_indices = @transform_1, window_bounds = array<i64: 128, 4>}, {pipeline_mode = #tpu.pipeline_mode<synchronous>, transform_indices = @transform_2, window_bounds = array<i64: 128, 1>}, {pipeline_mode = #tpu.pipeline_mode<synchronous>, transform_indices = @transform_3, window_bounds = array<i64: 2, 128, 128>}, {pipeline_mode = #tpu.pipeline_mode<synchronous>, transform_indices = @transform_4, window_bounds = array<i64: 2, 128, 1>}, {pipeline_mode = #tpu.pipeline_mode<synchronous>, transform_indices = @transform_5, window_bounds = array<i64: 128, 1>}, {pipeline_mode = #tpu.pipeline_mode<synchronous>, transform_indices = @transform_6, window_bounds = array<i64: 1, 1>}, {transform_indices = @transform_7, window_bounds = array<i64: 1, 128>}]} {
    %c0 = arith.constant 0 : index
    %c0_0 = arith.constant 0 : index
    %0 = vector.load %arg2[%c0, %c0_0] : memref<128x4xf32, #tpu.memory_space<vmem>>, vector<128x4xf32>
    %c0_1 = arith.constant 0 : index
    %c0_2 = arith.constant 0 : index
    %1 = vector.load %arg1[%c0_1, %c0_2] : memref<4x128xf32, #tpu.memory_space<vmem>>, vector<4x128xf32>
    %cst = arith.constant dense<0.000000e+00> : vector<128x128xf32>
    %2 = tpu.matmul %0, %1, %cst {dimension_numbers = #tpu.dot_dimension_numbers<[1], [0], [0], [1], [0, 0, 1, 1], [], []>} : vector<128x4xf32>, vector<4x128xf32>, vector<128x128xf32> -> vector<128x128xf32>
    %c0_3 = arith.constant 0 : index
    %c0_4 = arith.constant 0 : index
    %3 = vector.load %arg3[%c0_3, %c0_4] : memref<128x1xf32, #tpu.memory_space<vmem>>, vector<128x1xf32>
    %4 = vector.broadcast %3 : vector<128x1xf32> to vector<128x128xf32>
    %5 = arith.addf %2, %4 : vector<128x128xf32>
    %cst_5 = arith.constant 0.000000e+00 : f32
    %6 = vector.broadcast %cst_5 : f32 to vector<128x128xf32>
    %7 = arith.maximumf %5, %6 : vector<128x128xf32>
    %c0_6 = arith.constant 0 : index
    %c0_7 = arith.constant 0 : index
    %c0_8 = arith.constant 0 : index
    %8 = vector.load %arg4[%c0_6, %c0_7, %c0_8] : memref<2x128x128xf32, #tpu.memory_space<vmem>>, vector<1x128x128xf32>
    %9 = vector.shape_cast %8 : vector<1x128x128xf32> to vector<128x128xf32>
    %cst_9 = arith.constant dense<0.000000e+00> : vector<128x128xf32>
    %10 = tpu.matmul %9, %7, %cst_9 {dimension_numbers = #tpu.dot_dimension_numbers<[1], [0], [0], [1], [0, 0, 1, 1], [], []>} : vector<128x128xf32>, vector<128x128xf32>, vector<128x128xf32> -> vector<128x128xf32>
    %c0_10 = arith.constant 0 : index
    %c0_11 = arith.constant 0 : index
    %c0_12 = arith.constant 0 : index
    %11 = vector.load %arg5[%c0_10, %c0_11, %c0_12] : memref<2x128x1xf32, #tpu.memory_space<vmem>>, vector<1x128x1xf32>
    %12 = vector.shape_cast %11 : vector<1x128x1xf32> to vector<128x1xf32>
    %13 = vector.broadcast %12 : vector<128x1xf32> to vector<128x128xf32>
    %14 = arith.addf %10, %13 : vector<128x128xf32>
    %cst_13 = arith.constant 0.000000e+00 : f32
    %15 = vector.broadcast %cst_13 : f32 to vector<128x128xf32>
    %16 = arith.maximumf %14, %15 : vector<128x128xf32>
    %c1 = arith.constant 1 : index
    %c0_14 = arith.constant 0 : index
    %c0_15 = arith.constant 0 : index
    %17 = vector.load %arg4[%c1, %c0_14, %c0_15] : memref<2x128x128xf32, #tpu.memory_space<vmem>>, vector<1x128x128xf32>
    %18 = vector.shape_cast %17 : vector<1x128x128xf32> to vector<128x128xf32>
    %cst_16 = arith.constant dense<0.000000e+00> : vector<128x128xf32>
    %19 = tpu.matmul %18, %16, %cst_16 {dimension_numbers = #tpu.dot_dimension_numbers<[1], [0], [0], [1], [0, 0, 1, 1], [], []>} : vector<128x128xf32>, vector<128x128xf32>, vector<128x128xf32> -> vector<128x128xf32>
    %c1_17 = arith.constant 1 : index
    %c0_18 = arith.constant 0 : index
    %c0_19 = arith.constant 0 : index
    %20 = vector.load %arg5[%c1_17, %c0_18, %c0_19] : memref<2x128x1xf32, #tpu.memory_space<vmem>>, vector<1x128x1xf32>
    %21 = vector.shape_cast %20 : vector<1x128x1xf32> to vector<128x1xf32>
    %22 = vector.broadcast %21 : vector<128x1xf32> to vector<128x128xf32>
    %23 = arith.addf %19, %22 : vector<128x128xf32>
    %cst_20 = arith.constant 0.000000e+00 : f32
    %24 = vector.broadcast %cst_20 : f32 to vector<128x128xf32>
    %25 = arith.maximumf %23, %24 : vector<128x128xf32>
    %c0_21 = arith.constant 0 : index
    %c0_22 = arith.constant 0 : index
    %26 = vector.load %arg6[%c0_21, %c0_22] : memref<128x1xf32, #tpu.memory_space<vmem>>, vector<128x1xf32>
    %27 = vector.broadcast %26 : vector<128x1xf32> to vector<128x128xf32>
    %28 = arith.mulf %25, %27 : vector<128x128xf32>
    %cst_23 = arith.constant dense<0.000000e+00> : vector<128xf32>
    %29 = vector.multi_reduction <add>, %28, %cst_23 [0] : vector<128x128xf32> to vector<128xf32>
    %30 = vector.shape_cast %29 : vector<128xf32> to vector<1x128xf32>
    %c0_24 = arith.constant 0 : index
    %c0_25 = arith.constant 0 : index
    %31 = vector.load %arg7[%c0_24, %c0_25] : memref<1x1xf32, #tpu.memory_space<vmem>>, vector<1x1xf32>
    %32 = vector.broadcast %31 : vector<1x1xf32> to vector<1x128xf32>
    %33 = arith.addf %30, %32 : vector<1x128xf32>
    %c0_26 = arith.constant 0 : index
    %c0_27 = arith.constant 0 : index
    %34 = vector.load %arg8[%c0_26, %c0_27] : memref<1x128xf32, #tpu.memory_space<vmem>>, vector<1x128xf32>
    tpu.vector_store %arg8[%c0_26, %c0_27], %33 {strides = array<i32>} : memref<1x128xf32, #tpu.memory_space<vmem>>, vector<1x128xf32>,
    return
  }
  func.func @transform_0(%arg0: i32) -> (i32, i32) {
    %c0_i32 = arith.constant 0 : i32
    %c0_i32_0 = arith.constant 0 : i32
    return %c0_i32, %arg0 : i32, i32
  }
  func.func @transform_1(%arg0: i32) -> (i32, i32) {
    %c0_i32 = arith.constant 0 : i32
    %c0_i32_0 = arith.constant 0 : i32
    %c0_i32_1 = arith.constant 0 : i32
    return %c0_i32, %c0_i32_0 : i32, i32
  }
  func.func @transform_2(%arg0: i32) -> (i32, i32) {
    %c0_i32 = arith.constant 0 : i32
    %c0_i32_0 = arith.constant 0 : i32
    %c0_i32_1 = arith.constant 0 : i32
    return %c0_i32, %c0_i32_0 : i32, i32
  }
  func.func @transform_3(%arg0: i32) -> (i32, i32, i32) {
    %c0_i32 = arith.constant 0 : i32
    %c0_i32_0 = arith.constant 0 : i32
    %c0_i32_1 = arith.constant 0 : i32
    %c0_i32_2 = arith.constant 0 : i32
    return %c0_i32, %c0_i32_0, %c0_i32_1 : i32, i32, i32
  }
  func.func @transform_4(%arg0: i32) -> (i32, i32, i32) {
    %c0_i32 = arith.constant 0 : i32
    %c0_i32_0 = arith.constant 0 : i32
    %c0_i32_1 = arith.constant 0 : i32
    %c0_i32_2 = arith.constant 0 : i32
    return %c0_i32, %c0_i32_0, %c0_i32_1 : i32, i32, i32
  }
  func.func @transform_5(%arg0: i32) -> (i32, i32) {
    %c0_i32 = arith.constant 0 : i32
    %c0_i32_0 = arith.constant 0 : i32
    %c0_i32_1 = arith.constant 0 : i32
    return %c0_i32, %c0_i32_0 : i32, i32
  }
  func.func @transform_6(%arg0: i32) -> (i32, i32) {
    %c0_i32 = arith.constant 0 : i32
    %c0_i32_0 = arith.constant 0 : i32
    %c0_i32_1 = arith.constant 0 : i32
    return %c0_i32, %c0_i32_0 : i32, i32
  }
  func.func @transform_7(%arg0: i32) -> (i32, i32) {
    %c0_i32 = arith.constant 0 : i32
    %c0_i32_0 = arith.constant 0 : i32
    return %c0_i32, %arg0 : i32, i32
  }
}

</mosaic_0001>

<llo_original>
// kernel: tpu_custom_call.1
$region0: #{tpu_custom_call.1}
  #allocation0 [shape = 'u32[]', space=smem, size = 0x4, offset = 0x4, fixed_abs, tag = 'smem constant byte address 0x4 - core index']
  #allocation1 [shape = 'u32[144,128]{1,0:T(1,128)}', space=vmem, size = 0x12000, scoped, tag = 'internal scratch']
  #allocation2 [shape = 'f32[1,1]{1,0:T(1,128)S(1)}', space=vmem, size = 0x200, scoped, tag = 'scoped memory for tpu_custom_call.1']
  %s0 = inlined_call_operand.vmem [shape: f32[4,128], index: 0, kind: input, shape index: {}]
  %s1 = inlined_call_operand.vmem [shape: f32[128,4], index: 1, kind: input, shape index: {}]
  %s2 = inlined_call_operand.vmem [shape: f32[128,1], index: 2, kind: input, shape index: {}]
  %s3 = inlined_call_operand.vmem [shape: f32[2,128,128], index: 3, kind: input, shape index: {}]
  %s4 = inlined_call_operand.vmem [shape: f32[2,128,1], index: 4, kind: input, shape index: {}]
  %s5 = inlined_call_operand.vmem [shape: f32[128,1], index: 5, kind: input, shape index: {}]
  %s6 = inlined_call_operand.<no memory space> [shape: f32[1,1], index: 6, kind: input, shape index: {}]
  %s7 = inlined_call_operand.hbm [shape: f32[1,128], index: 7, kind: output, shape index: {}]
  %s8 = sld [smem:[#allocation0]]
  $region38: #{tpu_custom_call.1} parent=0
    _
  %s10 = ssub.s32 1, %s8
  %s11 = scalar_select 0, %s10, %s8
  %v12 = vstv %s6
  %13 = vst [vmem:[#allocation2] sm:$0x1] %v12
  $region1: #{tpu_custom_call.1} parent=0
    #allocation3 [shape = 'u8[512]{0}', space=vmem, size = 0x400, scoped, tag = 'output window, operand 0, single buffered']
    #allocation4 [shape = 's32[1]{0}', space=sflag, size = 0x4, scoped, tag = 'scoped memory for tpu_custom_call.1']
    %14 = vsyncpa [#allocation4], 0
    // Predicated region
    $region2: #{tpu_custom_call.1} parent=1 // pred_check
      _
    $region3: #{tpu_custom_call.1} parent=1 // pred_check_branch
      %16 = sbr.rel (0) target = $region5
    $region4: #{tpu_custom_call.1} parent=1 // pred_region
      _
    $region5: #{tpu_custom_call.1} parent=1 // pred_fallthru
      _
    // Predicated region
    $region6: #{tpu_custom_call.1} parent=1 // pred_check
      _
    $region7: #{tpu_custom_call.1} parent=1 // pred_check_branch
      %18 = sbr.rel (0) target = $region9
    $region8: #{tpu_custom_call.1} parent=1 // pred_region
      _
    $region9: #{tpu_custom_call.1} parent=1 // pred_fallthru
      _
    // Predicated region
    $region10: #{tpu_custom_call.1} parent=1 // pred_check
      _
    $region11: #{tpu_custom_call.1} parent=1 // pred_check_branch
      %20 = sbr.rel (0) target = $region13
    $region12: #{tpu_custom_call.1} parent=1 // pred_region
      _
    $region13: #{tpu_custom_call.1} parent=1 // pred_fallthru
      _
    // Predicated region
    $region14: #{tpu_custom_call.1} parent=1 // pred_check
      _
    $region15: #{tpu_custom_call.1} parent=1 // pred_check_branch
      %22 = sbr.rel (0) target = $region17
    $region16: #{tpu_custom_call.1} parent=1 // pred_region
      _
    $region17: #{tpu_custom_call.1} parent=1 // pred_fallthru
      _
    // Predicated region
    $region18: #{tpu_custom_call.1} parent=1 // pred_check
      _
    $region19: #{tpu_custom_call.1} parent=1 // pred_check_branch
      %24 = sbr.rel (0) target = $region21
    $region20: #{tpu_custom_call.1} parent=1 // pred_region
      _
    $region21: #{tpu_custom_call.1} parent=1 // pred_fallthru
      _
    // Predicated region
    $region22: #{tpu_custom_call.1} parent=1 // pred_check
      _
    $region23: #{tpu_custom_call.1} parent=1 // pred_check_branch
      %26 = sbr.rel (0) target = $region25
    $region24: #{tpu_custom_call.1} parent=1 // pred_region
      _
    $region25: #{tpu_custom_call.1} parent=1 // pred_fallthru
      _
    // Predicated region
    $region26: #{tpu_custom_call.1} parent=1 // pred_check
      _
    $region27: #{tpu_custom_call.1} parent=1 // pred_check_branch
      %28 = sbr.rel (0) target = $region29
    $region28: #{tpu_custom_call.1} parent=1 // pred_region
      _
    $region29: #{tpu_custom_call.1} parent=1 // pred_fallthru
      _
    %v29 = vld [vmem:[%s1] sm:$0xff]
    %v30 = vld [vmem:[%s1 + $0x8] sm:$0xff]
    %v31 = vld [vmem:[%s1 + $0x10] sm:$0xff]
    %v32 = vld [vmem:[%s1 + $0x18] sm:$0xff]
    %v33 = vld [vmem:[%s1 + $0x20] sm:$0xff]
    %v34 = vld [vmem:[%s1 + $0x28] sm:$0xff]
    %v35 = vld [vmem:[%s1 + $0x30] sm:$0xff]
    %v36 = vld [vmem:[%s1 + $0x38] sm:$0xff]
    %v37 = vld [vmem:[%s1 + $0x40] sm:$0xff]
    %v38 = vld [vmem:[%s1 + $0x48] sm:$0xff]
    %v39 = vld [vmem:[%s1 + $0x50] sm:$0xff]
    %v40 = vld [vmem:[%s1 + $0x58] sm:$0xff]
    %v41 = vld [vmem:[%s1 + $0x60] sm:$0xff]
    %v42 = vld [vmem:[%s1 + $0x68] sm:$0xff]
    %v43 = vld [vmem:[%s1 + $0x70] sm:$0xff]
    %v44 = vld [vmem:[%s1 + $0x78] sm:$0xff]
    %v45 = vld [vmem:[%s0] sm:$0xf]
    %v46 = vld [vmem:[%s2] sm:$0xff]
    %v47 = vld [vmem:[%s2 + $0x8] sm:$0xff]
    %v48 = vld [vmem:[%s2 + $0x10] sm:$0xff]
    %v49 = vld [vmem:[%s2 + $0x18] sm:$0xff]
    %v50 = vld [vmem:[%s2 + $0x20] sm:$0xff]
    %v51 = vld [vmem:[%s2 + $0x28] sm:$0xff]
    %v52 = vld [vmem:[%s2 + $0x30] sm:$0xff]
    %v53 = vld [vmem:[%s2 + $0x38] sm:$0xff]
    %v54 = vld [vmem:[%s2 + $0x40] sm:$0xff]
    %v55 = vld [vmem:[%s2 + $0x48] sm:$0xff]
    %v56 = vld [vmem:[%s2 + $0x50] sm:$0xff]
    %v57 = vld [vmem:[%s2 + $0x58] sm:$0xff]
    %v58 = vld [vmem:[%s2 + $0x60] sm:$0xff]
    %v59 = vld [vmem:[%s2 + $0x68] sm:$0xff]
    %v60 = vld [vmem:[%s2 + $0x70] sm:$0xff]
    %v61 = vld [vmem:[%s2 + $0x78] sm:$0xff]
    %63 = vset.pattern.permute.xlu0 0
    %64 = vperm.xlu0 %63, %v46
    %v65 = vpop.permute.xlu0 %64
    %68 = vset.pattern.permute.xlu0 0
    %69 = vperm.xlu0 %68, %v47
    %v70 = vpop.permute.xlu0 %69
    %73 = vset.pattern.permute.xlu0 0
    %74 = vperm.xlu0 %73, %v48
    %v75 = vpop.permute.xlu0 %74
    %78 = vset.pattern.permute.xlu0 0
    %79 = vperm.xlu0 %78, %v49
    %v80 = vpop.permute.xlu0 %79
    %83 = vset.pattern.permute.xlu0 0
    %84 = vperm.xlu0 %83, %v50
    %v85 = vpop.permute.xlu0 %84
    %88 = vset.pattern.permute.xlu0 0
    %89 = vperm.xlu0 %88, %v51
    %v90 = vpop.permute.xlu0 %89
    %93 = vset.pattern.permute.xlu0 0
    %94 = vperm.xlu0 %93, %v52
    %v95 = vpop.permute.xlu0 %94
    %98 = vset.pattern.permute.xlu0 0
    %99 = vperm.xlu0 %98, %v53
    %v100 = vpop.permute.xlu0 %99
    %103 = vset.pattern.permute.xlu0 0
    %104 = vperm.xlu0 %103, %v54
    %v105 = vpop.permute.xlu0 %104
    %108 = vset.pattern.permute.xlu0 0
    %109 = vperm.xlu0 %108, %v55
    %v110 = vpop.permute.xlu0 %109
    %113 = vset.pattern.permute.xlu0 0
    %114 = vperm.xlu0 %113, %v56
    %v115 = vpop.permute.xlu0 %114
    %118 = vset.pattern.permute.xlu0 0
    %119 = vperm.xlu0 %118, %v57
    %v120 = vpop.permute.xlu0 %119
    %123 = vset.pattern.permute.xlu0 0
    %124 = vperm.xlu0 %123, %v58
    %v125 = vpop.permute.xlu0 %124
    %128 = vset.pattern.permute.xlu0 0
    %129 = vperm.xlu0 %128, %v59
    %v130 = vpop.permute.xlu0 %129
    %133 = vset.pattern.permute.xlu0 0
    %134 = vperm.xlu0 %133, %v60
    %v135 = vpop.permute.xlu0 %134
    %138 = vset.pattern.permute.xlu0 0
    %139 = vperm.xlu0 %138, %v61
    %v140 = vpop.permute.xlu0 %139
    %vm142 = vcmask 31744
    %v144 = vsel %vm142, %v29, 0
    %v147 = vsel %vm142, %v30, 0
    %v150 = vsel %vm142, %v31, 0
    %v153 = vsel %vm142, %v32, 0
    %v156 = vsel %vm142, %v33, 0
    %v159 = vsel %vm142, %v34, 0
    %v162 = vsel %vm142, %v35, 0
    %v165 = vsel %vm142, %v36, 0
    %v168 = vsel %vm142, %v37, 0
    %v171 = vsel %vm142, %v38, 0
    %v174 = vsel %vm142, %v39, 0
    %v177 = vsel %vm142, %v40, 0
    %v180 = vsel %vm142, %v41, 0
    %v183 = vsel %vm142, %v42, 0
    %v186 = vsel %vm142, %v43, 0
    %v189 = vsel %vm142, %v44, 0
    %vm191 = vcmask 1043456
    %v193 = vsel %vm191, %v45, 0
    %195 = vmatprep.subr.mxu0 0.0
    %196 = vmatpush1.msra.mxu0 %v193
    %197 = vmatprep.subr.mxu0 0.0
    %198 = vmatpush1.msra.mxu0 0.0
    %199 = vmatprep.subr.mxu0 0.0
    %200 = vmatpush1.msra.mxu0 0.0
    %201 = vmatprep.subr.mxu0 0.0
    %202 = vmatpush1.msra.mxu0 0.0
    %203 = vmatprep.subr.mxu0 0.0
    %204 = vmatpush1.msra.mxu0 0.0
    %205 = vmatprep.subr.mxu0 0.0
    %206 = vmatpush1.msra.mxu0 0.0
    %207 = vmatprep.subr.mxu0 0.0
    %208 = vmatpush1.msra.mxu0 0.0
    %209 = vmatprep.subr.mxu0 0.0
    %210 = vmatpush1.msra.mxu0 0.0
    %211 = vmatprep.subr.mxu0 0.0
    %212 = vmatpush1.msra.mxu0 0.0
    %213 = vmatprep.subr.mxu0 0.0
    %214 = vmatpush1.msra.mxu0 0.0
    %215 = vmatprep.subr.mxu0 0.0
    %216 = vmatpush1.msra.mxu0 0.0
    %217 = vmatprep.subr.mxu0 0.0
    %218 = vmatpush1.msra.mxu0 0.0
    %219 = vmatprep.subr.mxu0 0.0
    %220 = vmatpush1.msra.mxu0 0.0
    %221 = vmatprep.subr.mxu0 0.0
    %222 = vmatpush1.msra.mxu0 0.0
    %223 = vmatprep.subr.mxu0 0.0
    %224 = vmatpush1.msra.mxu0 0.0
    %225 = vmatprep.subr.mxu0 0.0
    %226 = vmatpush1.msra.mxu0 0.0
    %227 = vmatprep.subr.mxu0 0.0
    %228 = vmatpush1.msra.mxu0 0.0
    %229 = vmatprep.subr.mxu0 0.0
    %230 = vmatpush1.msra.mxu0 0.0
    %231 = vmatprep.subr.mxu0 0.0
    %232 = vmatpush1.msra.mxu0 0.0
    %233 = vmatprep.subr.mxu0 0.0
    %234 = vmatpush1.msra.mxu0 0.0
    %235 = vmatprep.subr.mxu0 0.0
    %236 = vmatpush1.msra.mxu0 0.0
    %237 = vmatprep.subr.mxu0 0.0
    %238 = vmatpush1.msra.mxu0 0.0
    %239 = vmatprep.subr.mxu0 0.0
    %240 = vmatpush1.msra.mxu0 0.0
    %241 = vmatprep.subr.mxu0 0.0
    %242 = vmatpush1.msra.mxu0 0.0
    %243 = vmatprep.subr.mxu0 0.0
    %244 = vmatpush1.msra.mxu0 0.0
    %245 = vmatprep.subr.mxu0 0.0
    %246 = vmatpush1.msra.mxu0 0.0
    %247 = vmatprep.subr.mxu0 0.0
    %248 = vmatpush1.msra.mxu0 0.0
    %249 = vmatprep.subr.mxu0 0.0
    %250 = vmatpush1.msra.mxu0 0.0
    %251 = vmatprep.subr.mxu0 0.0
    %252 = vmatpush1.msra.mxu0 0.0
    %253 = vmatprep.subr.mxu0 0.0
    %254 = vmatpush1.msra.mxu0 0.0
    %255 = vmatprep.subr.mxu0 0.0
    %256 = vmatpush1.msra.mxu0 0.0
    %257 = vmatprep.subr.mxu0 0.0
    %258 = vmatpush1.msra.mxu0 0.0
    %259 = vmatprep.mubr.f32.mxu0 0.0
    %260 = vmatmul.mubr.f32.gmra.mrb[0].mxu0 %v144
    %v261 = vpop.f32.mrb[0].mxu0
    %v262 = vadd.f32 %v65, %v261
    %v263 = vpop.f32.mrb[0].mxu0
    %264 = vmatprep.mubr.f32.mxu0 0.0
    %265 = vmatmul.mubr.f32.gmra.mrb[0].mxu0 %v147
    %v266 = vpop.f32.mrb[0].mxu0
    %v267 = vadd.f32 %v70, %v266
    %v268 = vpop.f32.mrb[0].mxu0
    %269 = vmatprep.mubr.f32.mxu0 0.0
    %270 = vmatmul.mubr.f32.gmra.mrb[0].mxu0 %v150
    %v271 = vpop.f32.mrb[0].mxu0
    %v272 = vadd.f32 %v75, %v271
    %v273 = vpop.f32.mrb[0].mxu0
    %274 = vmatprep.mubr.f32.mxu0 0.0
    %275 = vmatmul.mubr.f32.gmra.mrb[0].mxu0 %v153
    %v276 = vpop.f32.mrb[0].mxu0
    %v277 = vadd.f32 %v80, %v276
    %v278 = vpop.f32.mrb[0].mxu0
    %279 = vmatprep.mubr.f32.mxu0 0.0
    %280 = vmatmul.mubr.f32.gmra.mrb[0].mxu0 %v156
    %v281 = vpop.f32.mrb[0].mxu0
    %v282 = vadd.f32 %v85, %v281
    %v283 = vpop.f32.mrb[0].mxu0
    %284 = vmatprep.mubr.f32.mxu0 0.0
    %285 = vmatmul.mubr.f32.gmra.mrb[0].mxu0 %v159
    %v286 = vpop.f32.mrb[0].mxu0
    %v287 = vadd.f32 %v90, %v286
    %v288 = vpop.f32.mrb[0].mxu0
    %289 = vmatprep.mubr.f32.mxu0 0.0
    %290 = vmatmul.mubr.f32.gmra.mrb[0].mxu0 %v162
    %v291 = vpop.f32.mrb[0].mxu0
    %v292 = vadd.f32 %v95, %v291
    %v293 = vpop.f32.mrb[0].mxu0
    %294 = vmatprep.mubr.f32.mxu0 0.0
    %295 = vmatmul.mubr.f32.gmra.mrb[0].mxu0 %v165
    %v296 = vpop.f32.mrb[0].mxu0
    %v297 = vadd.f32 %v100, %v296
    %v298 = vpop.f32.mrb[0].mxu0
    %299 = vmatprep.mubr.f32.mxu0 0.0
    %300 = vmatmul.mubr.f32.gmra.mrb[0].mxu0 %v168
    %v301 = vpop.f32.mrb[0].mxu0
    %v302 = vadd.f32 %v105, %v301
    %v303 = vpop.f32.mrb[0].mxu0
    %304 = vmatprep.mubr.f32.mxu0 0.0
    %305 = vmatmul.mubr.f32.gmra.mrb[0].mxu0 %v171
    %v306 = vpop.f32.mrb[0].mxu0
    %v307 = vadd.f32 %v110, %v306
    %v308 = vpop.f32.mrb[0].mxu0
    %309 = vmatprep.mubr.f32.mxu0 0.0
    %310 = vmatmul.mubr.f32.gmra.mrb[0].mxu0 %v174
    %v311 = vpop.f32.mrb[0].mxu0
    %v312 = vadd.f32 %v115, %v311
    %v313 = vpop.f32.mrb[0].mxu0
    %314 = vmatprep.mubr.f32.mxu0 0.0
    %315 = vmatmul.mubr.f32.gmra.mrb[0].mxu0 %v177
    %v316 = vpop.f32.mrb[0].mxu0
    %v317 = vadd.f32 %v120, %v316
    %v318 = vpop.f32.mrb[0].mxu0
    %319 = vmatprep.mubr.f32.mxu0 0.0
    %320 = vmatmul.mubr.f32.gmra.mrb[0].mxu0 %v180
    %v321 = vpop.f32.mrb[0].mxu0
    %v322 = vadd.f32 %v125, %v321
    %v323 = vpop.f32.mrb[0].mxu0
    %324 = vmatprep.mubr.f32.mxu0 0.0
    %325 = vmatmul.mubr.f32.gmra.mrb[0].mxu0 %v183
    %v326 = vpop.f32.mrb[0].mxu0
    %v327 = vadd.f32 %v130, %v326
    %v328 = vpop.f32.mrb[0].mxu0
    %329 = vmatprep.mubr.f32.mxu0 0.0
    %330 = vmatmul.mubr.f32.gmra.mrb[0].mxu0 %v186
    %v331 = vpop.f32.mrb[0].mxu0
    %v332 = vadd.f32 %v135, %v331
    %v333 = vpop.f32.mrb[0].mxu0
    %334 = vmatprep.mubr.f32.mxu0 0.0
    %335 = vmatmul.mubr.f32.gmra.mrb[0].mxu0 %v189
    %v336 = vpop.f32.mrb[0].mxu0
    %v337 = vadd.f32 %v140, %v336
    %v338 = vpop.f32.mrb[0].mxu0
    %339 = vdwg.mxu0
    %v340 = vmax.f32 %v262, 0.0
    %v341 = vmax.f32 %v267, 0.0
    %v342 = vmax.f32 %v272, 0.0
    %v343 = vmax.f32 %v277, 0.0
    %v344 = vmax.f32 %v282, 0.0
    %v345 = vmax.f32 %v287, 0.0
    %v346 = vmax.f32 %v292, 0.0
    %v347 = vmax.f32 %v297, 0.0
    %v348 = vmax.f32 %v302, 0.0
    %v349 = vmax.f32 %v307, 0.0
    %v350 = vmax.f32 %v312, 0.0
    %v351 = vmax.f32 %v317, 0.0
    %v352 = vmax.f32 %v322, 0.0
    %v353 = vmax.f32 %v327, 0.0
    %v354 = vmax.f32 %v332, 0.0
    %v355 = vmax.f32 %v337, 0.0
    %v356 = vld [vmem:[%s3] sm:$0xff]
    %v357 = vld [vmem:[%s3 + $0x8] sm:$0xff]
    %v358 = vld [vmem:[%s3 + $0x10] sm:$0xff]
    %v359 = vld [vmem:[%s3 + $0x18] sm:$0xff]
    %v360 = vld [vmem:[%s3 + $0x20] sm:$0xff]
    %v361 = vld [vmem:[%s3 + $0x28] sm:$0xff]
    %v362 = vld [vmem:[%s3 + $0x30] sm:$0xff]
    %v363 = vld [vmem:[%s3 + $0x38] sm:$0xff]
    %v364 = vld [vmem:[%s3 + $0x40] sm:$0xff]
    %v365 = vld [vmem:[%s3 + $0x48] sm:$0xff]
    %v366 = vld [vmem:[%s3 + $0x50] sm:$0xff]
    %v367 = vld [vmem:[%s3 + $0x58] sm:$0xff]
    %v368 = vld [vmem:[%s3 + $0x60] sm:$0xff]
    %v369 = vld [vmem:[%s3 + $0x68] sm:$0xff]
    %v370 = vld [vmem:[%s3 + $0x70] sm:$0xff]
    %v371 = vld [vmem:[%s3 + $0x78] sm:$0xff]
    %v372 = vld [vmem:[%s4] sm:$0xff]
    %v373 = vld [vmem:[%s4 + $0x8] sm:$0xff]
    %v374 = vld [vmem:[%s4 + $0x10] sm:$0xff]
    %v375 = vld [vmem:[%s4 + $0x18] sm:$0xff]
    %v376 = vld [vmem:[%s4 + $0x20] sm:$0xff]
    %v377 = vld [vmem:[%s4 + $0x28] sm:$0xff]
    %v378 = vld [vmem:[%s4 + $0x30] sm:$0xff]
    %v379 = vld [vmem:[%s4 + $0x38] sm:$0xff]
    %v380 = vld [vmem:[%s4 + $0x40] sm:$0xff]
    %v381 = vld [vmem:[%s4 + $0x48] sm:$0xff]
    %v382 = vld [vmem:[%s4 + $0x50] sm:$0xff]
    %v383 = vld [vmem:[%s4 + $0x58] sm:$0xff]
    %v384 = vld [vmem:[%s4 + $0x60] sm:$0xff]
    %v385 = vld [vmem:[%s4 + $0x68] sm:$0xff]
    %v386 = vld [vmem:[%s4 + $0x70] sm:$0xff]
    %v387 = vld [vmem:[%s4 + $0x78] sm:$0xff]
    %389 = vset.pattern.permute.xlu0 0
    %390 = vperm.xlu0 %389, %v372
    %v391 = vpop.permute.xlu0 %390
    %394 = vset.pattern.permute.xlu0 0
    %395 = vperm.xlu0 %394, %v373
    %v396 = vpop.permute.xlu0 %395
    %399 = vset.pattern.permute.xlu0 0
    %400 = vperm.xlu0 %399, %v374
    %v401 = vpop.permute.xlu0 %400
    %404 = vset.pattern.permute.xlu0 0
    %405 = vperm.xlu0 %404, %v375
    %v406 = vpop.permute.xlu0 %405
    %409 = vset.pattern.permute.xlu0 0
    %410 = vperm.xlu0 %409, %v376
    %v411 = vpop.permute.xlu0 %410
    %414 = vset.pattern.permute.xlu0 0
    %415 = vperm.xlu0 %414, %v377
    %v416 = vpop.permute.xlu0 %415
    %419 = vset.pattern.permute.xlu0 0
    %420 = vperm.xlu0 %419, %v378
    %v421 = vpop.permute.xlu0 %420
    %424 = vset.pattern.permute.xlu0 0
    %425 = vperm.xlu0 %424, %v379
    %v426 = vpop.permute.xlu0 %425
    %429 = vset.pattern.permute.xlu0 0
    %430 = vperm.xlu0 %429, %v380
    %v431 = vpop.permute.xlu0 %430
    %434 = vset.pattern.permute.xlu0 0
    %435 = vperm.xlu0 %434, %v381
    %v436 = vpop.permute.xlu0 %435
    %439 = vset.pattern.permute.xlu0 0
    %440 = vperm.xlu0 %439, %v382
    %v441 = vpop.permute.xlu0 %440
    %444 = vset.pattern.permute.xlu0 0
    %445 = vperm.xlu0 %444, %v383
    %v446 = vpop.permute.xlu0 %445
    %449 = vset.pattern.permute.xlu0 0
    %450 = vperm.xlu0 %449, %v384
    %v451 = vpop.permute.xlu0 %450
    %454 = vset.pattern.permute.xlu0 0
    %455 = vperm.xlu0 %454, %v385
    %v456 = vpop.permute.xlu0 %455
    %459 = vset.pattern.permute.xlu0 0
    %460 = vperm.xlu0 %459, %v386
    %v461 = vpop.permute.xlu0 %460
    %464 = vset.pattern.permute.xlu0 0
    %465 = vperm.xlu0 %464, %v387
    %v466 = vpop.permute.xlu0 %465
    %468 = vmatprep.subr.mxu0 0.0
    %469 = vmatpush1.msra.mxu0 %v340
    %470 = vmatprep.subr.mxu0 0.0
    %471 = vmatpush1.msra.mxu0 %v341
    %472 = vmatprep.subr.mxu0 0.0
    %473 = vmatpush1.msra.mxu0 %v342
    %474 = vmatprep.subr.mxu0 0.0
    %475 = vmatpush1.msra.mxu0 %v343
    %476 = vmatprep.subr.mxu0 0.0
    %477 = vmatpush1.msra.mxu0 %v344
    %478 = vmatprep.subr.mxu0 0.0
    %479 = vmatpush1.msra.mxu0 %v345
    %480 = vmatprep.subr.mxu0 0.0
    %481 = vmatpush1.msra.mxu0 %v346
    %482 = vmatprep.subr.mxu0 0.0
    %483 = vmatpush1.msra.mxu0 %v347
    %484 = vmatprep.subr.mxu0 0.0
    %485 = vmatpush1.msra.mxu0 %v348
    %486 = vmatprep.subr.mxu0 0.0
    %487 = vmatpush1.msra.mxu0 %v349
    %488 = vmatprep.subr.mxu0 0.0
    %489 = vmatpush1.msra.mxu0 %v350
    %490 = vmatprep.subr.mxu0 0.0
    %491 = vmatpush1.msra.mxu0 %v351
    %492 = vmatprep.subr.mxu0 0.0
    %493 = vmatpush1.msra.mxu0 %v352
    %494 = vmatprep.subr.mxu0 0.0
    %495 = vmatpush1.msra.mxu0 %v353
    %496 = vmatprep.subr.mxu0 0.0
    %497 = vmatpush1.msra.mxu0 %v354
    %498 = vmatprep.subr.mxu0 0.0
    %499 = vmatpush1.msra.mxu0 %v355
    %500 = vmatprep.subr.mxu0 0.0
    %501 = vmatpush1.msra.mxu0 0.0
    %502 = vmatprep.subr.mxu0 0.0
    %503 = vmatpush1.msra.mxu0 0.0
    %504 = vmatprep.subr.mxu0 0.0
    %505 = vmatpush1.msra.mxu0 0.0
    %506 = vmatprep.subr.mxu0 0.0
    %507 = vmatpush1.msra.mxu0 0.0
    %508 = vmatprep.subr.mxu0 0.0
    %509 = vmatpush1.msra.mxu0 0.0
    %510 = vmatprep.subr.mxu0 0.0
    %511 = vmatpush1.msra.mxu0 0.0
    %512 = vmatprep.subr.mxu0 0.0
    %513 = vmatpush1.msra.mxu0 0.0
    %514 = vmatprep.subr.mxu0 0.0
    %515 = vmatpush1.msra.mxu0 0.0
    %516 = vmatprep.subr.mxu0 0.0
    %517 = vmatpush1.msra.mxu0 0.0
    %518 = vmatprep.subr.mxu0 0.0
    %519 = vmatpush1.msra.mxu0 0.0
    %520 = vmatprep.subr.mxu0 0.0
    %521 = vmatpush1.msra.mxu0 0.0
    %522 = vmatprep.subr.mxu0 0.0
    %523 = vmatpush1.msra.mxu0 0.0
    %524 = vmatprep.subr.mxu0 0.0
    %525 = vmatpush1.msra.mxu0 0.0
    %526 = vmatprep.subr.mxu0 0.0
    %527 = vmatpush1.msra.mxu0 0.0
    %528 = vmatprep.subr.mxu0 0.0
    %529 = vmatpush1.msra.mxu0 0.0
    %530 = vmatprep.subr.mxu0 0.0
    %531 = vmatpush1.msra.mxu0 0.0
    %532 = vmatprep.mubr.f32.mxu0 0.0
    %533 = vmatmul.mubr.f32.gmra.mrb[0].mxu0 %v356
    %v534 = vpop.f32.mrb[0].mxu0
    %v535 = vadd.f32 %v391, %v534
    %v536 = vpop.f32.mrb[0].mxu0
    %537 = vmatprep.mubr.f32.mxu0 0.0
    %538 = vmatmul.mubr.f32.gmra.mrb[0].mxu0 %v357
    %v539 = vpop.f32.mrb[0].mxu0
    %v540 = vadd.f32 %v396, %v539
    %v541 = vpop.f32.mrb[0].mxu0
    %542 = vmatprep.mubr.f32.mxu0 0.0
    %543 = vmatmul.mubr.f32.gmra.mrb[0].mxu0 %v358
    %v544 = vpop.f32.mrb[0].mxu0
    %v545 = vadd.f32 %v401, %v544
    %v546 = vpop.f32.mrb[0].mxu0
    %547 = vmatprep.mubr.f32.mxu0 0.0
    %548 = vmatmul.mubr.f32.gmra.mrb[0].mxu0 %v359
    %v549 = vpop.f32.mrb[0].mxu0
    %v550 = vadd.f32 %v406, %v549
    %v551 = vpop.f32.mrb[0].mxu0
    %552 = vmatprep.mubr.f32.mxu0 0.0
    %553 = vmatmul.mubr.f32.gmra.mrb[0].mxu0 %v360
    %v554 = vpop.f32.mrb[0].mxu0
    %v555 = vadd.f32 %v411, %v554
    %v556 = vpop.f32.mrb[0].mxu0
    %557 = vmatprep.mubr.f32.mxu0 0.0
    %558 = vmatmul.mubr.f32.gmra.mrb[0].mxu0 %v361
    %v559 = vpop.f32.mrb[0].mxu0
    %v560 = vadd.f32 %v416, %v559
    %v561 = vpop.f32.mrb[0].mxu0
    %562 = vmatprep.mubr.f32.mxu0 0.0
    %563 = vmatmul.mubr.f32.gmra.mrb[0].mxu0 %v362
    %v564 = vpop.f32.mrb[0].mxu0
    %v565 = vadd.f32 %v421, %v564
    %v566 = vpop.f32.mrb[0].mxu0
    %567 = vmatprep.mubr.f32.mxu0 0.0
    %568 = vmatmul.mubr.f32.gmra.mrb[0].mxu0 %v363
    %v569 = vpop.f32.mrb[0].mxu0
    %v570 = vadd.f32 %v426, %v569
    %v571 = vpop.f32.mrb[0].mxu0
    %572 = vmatprep.mubr.f32.mxu0 0.0
    %573 = vmatmul.mubr.f32.gmra.mrb[0].mxu0 %v364
    %v574 = vpop.f32.mrb[0].mxu0
    %v575 = vadd.f32 %v431, %v574
    %v576 = vpop.f32.mrb[0].mxu0
    %577 = vmatprep.mubr.f32.mxu0 0.0
    %578 = vmatmul.mubr.f32.gmra.mrb[0].mxu0 %v365
    %v579 = vpop.f32.mrb[0].mxu0
    %v580 = vadd.f32 %v436, %v579
    %v581 = vpop.f32.mrb[0].mxu0
    %582 = vmatprep.mubr.f32.mxu0 0.0
    %583 = vmatmul.mubr.f32.gmra.mrb[0].mxu0 %v366
    %v584 = vpop.f32.mrb[0].mxu0
    %v585 = vadd.f32 %v441, %v584
    %v586 = vpop.f32.mrb[0].mxu0
    %587 = vmatprep.mubr.f32.mxu0 0.0
    %588 = vmatmul.mubr.f32.gmra.mrb[0].mxu0 %v367
    %v589 = vpop.f32.mrb[0].mxu0
    %v590 = vadd.f32 %v446, %v589
    %v591 = vpop.f32.mrb[0].mxu0
    %592 = vmatprep.mubr.f32.mxu0 0.0
    %593 = vmatmul.mubr.f32.gmra.mrb[0].mxu0 %v368
    %v594 = vpop.f32.mrb[0].mxu0
    %v595 = vadd.f32 %v451, %v594
    %v596 = vpop.f32.mrb[0].mxu0
    %597 = vmatprep.mubr.f32.mxu0 0.0
    %598 = vmatmul.mubr.f32.gmra.mrb[0].mxu0 %v369
    %v599 = vpop.f32.mrb[0].mxu0
    %v600 = vadd.f32 %v456, %v599
    %v601 = vpop.f32.mrb[0].mxu0
    %602 = vmatprep.mubr.f32.mxu0 0.0
    %603 = vmatmul.mubr.f32.gmra.mrb[0].mxu0 %v370
    %v604 = vpop.f32.mrb[0].mxu0
    %v605 = vadd.f32 %v461, %v604
    %v606 = vpop.f32.mrb[0].mxu0
    %607 = vmatprep.mubr.f32.mxu0 0.0
    %608 = vmatmul.mubr.f32.gmra.mrb[0].mxu0 %v371
    %v609 = vpop.f32.mrb[0].mxu0
    %v610 = vadd.f32 %v466, %v609
    %v611 = vpop.f32.mrb[0].mxu0
    %612 = vdwg.mxu0
    %v613 = vmax.f32 %v535, 0.0
    %v614 = vmax.f32 %v540, 0.0
    %v615 = vmax.f32 %v545, 0.0
    %v616 = vmax.f32 %v550, 0.0
    %v617 = vmax.f32 %v555, 0.0
    %v618 = vmax.f32 %v560, 0.0
    %v619 = vmax.f32 %v565, 0.0
    %v620 = vmax.f32 %v570, 0.0
    %v621 = vmax.f32 %v575, 0.0
    %v622 = vmax.f32 %v580, 0.0
    %v623 = vmax.f32 %v585, 0.0
    %v624 = vmax.f32 %v590, 0.0
    %v625 = vmax.f32 %v595, 0.0
    %v626 = vmax.f32 %v600, 0.0
    %v627 = vmax.f32 %v605, 0.0
    %v628 = vmax.f32 %v610, 0.0
    %s629 = scalar_lea.vmem %s3, 128
    %v630 = vld [vmem:[%s629] sm:$0xff]
    %v631 = vld [vmem:[%s629 + $0x8] sm:$0xff]
    %v632 = vld [vmem:[%s629 + $0x10] sm:$0xff]
    %v633 = vld [vmem:[%s629 + $0x18] sm:$0xff]
    %v634 = vld [vmem:[%s629 + $0x20] sm:$0xff]
    %v635 = vld [vmem:[%s629 + $0x28] sm:$0xff]
    %v636 = vld [vmem:[%s629 + $0x30] sm:$0xff]
    %v637 = vld [vmem:[%s629 + $0x38] sm:$0xff]
    %v638 = vld [vmem:[%s629 + $0x40] sm:$0xff]
    %v639 = vld [vmem:[%s629 + $0x48] sm:$0xff]
    %v640 = vld [vmem:[%s629 + $0x50] sm:$0xff]
    %v641 = vld [vmem:[%s629 + $0x58] sm:$0xff]
    %v642 = vld [vmem:[%s629 + $0x60] sm:$0xff]
    %v643 = vld [vmem:[%s629 + $0x68] sm:$0xff]
    %v644 = vld [vmem:[%s629 + $0x70] sm:$0xff]
    %v645 = vld [vmem:[%s629 + $0x78] sm:$0xff]
    %s646 = scalar_lea.vmem %s4, 128
    %v647 = vld [vmem:[%s646] sm:$0xff]
    %v648 = vld [vmem:[%s646 + $0x8] sm:$0xff]
    %v649 = vld [vmem:[%s646 + $0x10] sm:$0xff]
    %v650 = vld [vmem:[%s646 + $0x18] sm:$0xff]
    %v651 = vld [vmem:[%s646 + $0x20] sm:$0xff]
    %v652 = vld [vmem:[%s646 + $0x28] sm:$0xff]
    %v653 = vld [vmem:[%s646 + $0x30] sm:$0xff]
    %v654 = vld [vmem:[%s646 + $0x38] sm:$0xff]
    %v655 = vld [vmem:[%s646 + $0x40] sm:$0xff]
    %v656 = vld [vmem:[%s646 + $0x48] sm:$0xff]
    %v657 = vld [vmem:[%s646 + $0x50] sm:$0xff]
    %v658 = vld [vmem:[%s646 + $0x58] sm:$0xff]
    %v659 = vld [vmem:[%s646 + $0x60] sm:$0xff]
    %v660 = vld [vmem:[%s646 + $0x68] sm:$0xff]
    %v661 = vld [vmem:[%s646 + $0x70] sm:$0xff]
    %v662 = vld [vmem:[%s646 + $0x78] sm:$0xff]
    %664 = vset.pattern.permute.xlu0 0
    %665 = vperm.xlu0 %664, %v647
    %v666 = vpop.permute.xlu0 %665
    %669 = vset.pattern.permute.xlu0 0
    %670 = vperm.xlu0 %669, %v648
    %v671 = vpop.permute.xlu0 %670
    %674 = vset.pattern.permute.xlu0 0
    %675 = vperm.xlu0 %674, %v649
    %v676 = vpop.permute.xlu0 %675
    %679 = vset.pattern.permute.xlu0 0
    %680 = vperm.xlu0 %679, %v650
    %v681 = vpop.permute.xlu0 %680
    %684 = vset.pattern.permute.xlu0 0
    %685 = vperm.xlu0 %684, %v651
    %v686 = vpop.permute.xlu0 %685
    %689 = vset.pattern.permute.xlu0 0
    %690 = vperm.xlu0 %689, %v652
    %v691 = vpop.permute.xlu0 %690
    %694 = vset.pattern.permute.xlu0 0
    %695 = vperm.xlu0 %694, %v653
    %v696 = vpop.permute.xlu0 %695
    %699 = vset.pattern.permute.xlu0 0
    %700 = vperm.xlu0 %699, %v654
    %v701 = vpop.permute.xlu0 %700
    %704 = vset.pattern.permute.xlu0 0
    %705 = vperm.xlu0 %704, %v655
    %v706 = vpop.permute.xlu0 %705
    %709 = vset.pattern.permute.xlu0 0
    %710 = vperm.xlu0 %709, %v656
    %v711 = vpop.permute.xlu0 %710
    %714 = vset.pattern.permute.xlu0 0
    %715 = vperm.xlu0 %714, %v657
    %v716 = vpop.permute.xlu0 %715
    %719 = vset.pattern.permute.xlu0 0
    %720 = vperm.xlu0 %719, %v658
    %v721 = vpop.permute.xlu0 %720
    %724 = vset.pattern.permute.xlu0 0
    %725 = vperm.xlu0 %724, %v659
    %v726 = vpop.permute.xlu0 %725
    %729 = vset.pattern.permute.xlu0 0
    %730 = vperm.xlu0 %729, %v660
    %v731 = vpop.permute.xlu0 %730
    %734 = vset.pattern.permute.xlu0 0
    %735 = vperm.xlu0 %734, %v661
    %v736 = vpop.permute.xlu0 %735
    %739 = vset.pattern.permute.xlu0 0
    %740 = vperm.xlu0 %739, %v662
    %v741 = vpop.permute.xlu0 %740
    %743 = vmatprep.subr.mxu0 0.0
    %744 = vmatpush1.msra.mxu0 %v613
    %745 = vmatprep.subr.mxu0 0.0
    %746 = vmatpush1.msra.mxu0 %v614
    %747 = vmatprep.subr.mxu0 0.0
    %748 = vmatpush1.msra.mxu0 %v615
    %749 = vmatprep.subr.mxu0 0.0
    %750 = vmatpush1.msra.mxu0 %v616
    %751 = vmatprep.subr.mxu0 0.0
    %752 = vmatpush1.msra.mxu0 %v617
    %753 = vmatprep.subr.mxu0 0.0
    %754 = vmatpush1.msra.mxu0 %v618
    %755 = vmatprep.subr.mxu0 0.0
    %756 = vmatpush1.msra.mxu0 %v619
    %757 = vmatprep.subr.mxu0 0.0
    %758 = vmatpush1.msra.mxu0 %v620
    %759 = vmatprep.subr.mxu0 0.0
    %760 = vmatpush1.msra.mxu0 %v621
    %761 = vmatprep.subr.mxu0 0.0
    %762 = vmatpush1.msra.mxu0 %v622
    %763 = vmatprep.subr.mxu0 0.0
    %764 = vmatpush1.msra.mxu0 %v623
    %765 = vmatprep.subr.mxu0 0.0
    %766 = vmatpush1.msra.mxu0 %v624
    %767 = vmatprep.subr.mxu0 0.0
    %768 = vmatpush1.msra.mxu0 %v625
    %769 = vmatprep.subr.mxu0 0.0
    %770 = vmatpush1.msra.mxu0 %v626
    %771 = vmatprep.subr.mxu0 0.0
    %772 = vmatpush1.msra.mxu0 %v627
    %773 = vmatprep.subr.mxu0 0.0
    %774 = vmatpush1.msra.mxu0 %v628
    %775 = vmatprep.subr.mxu0 0.0
    %776 = vmatpush1.msra.mxu0 0.0
    %777 = vmatprep.subr.mxu0 0.0
    %778 = vmatpush1.msra.mxu0 0.0
    %779 = vmatprep.subr.mxu0 0.0
    %780 = vmatpush1.msra.mxu0 0.0
    %781 = vmatprep.subr.mxu0 0.0
    %782 = vmatpush1.msra.mxu0 0.0
    %783 = vmatprep.subr.mxu0 0.0
    %784 = vmatpush1.msra.mxu0 0.0
    %785 = vmatprep.subr.mxu0 0.0
    %786 = vmatpush1.msra.mxu0 0.0
    %787 = vmatprep.subr.mxu0 0.0
    %788 = vmatpush1.msra.mxu0 0.0
    %789 = vmatprep.subr.mxu0 0.0
    %790 = vmatpush1.msra.mxu0 0.0
    %791 = vmatprep.subr.mxu0 0.0
    %792 = vmatpush1.msra.mxu0 0.0
    %793 = vmatprep.subr.mxu0 0.0
    %794 = vmatpush1.msra.mxu0 0.0
    %795 = vmatprep.subr.mxu0 0.0
    %796 = vmatpush1.msra.mxu0 0.0
    %797 = vmatprep.subr.mxu0 0.0
    %798 = vmatpush1.msra.mxu0 0.0
    %799 = vmatprep.subr.mxu0 0.0
    %800 = vmatpush1.msra.mxu0 0.0
    %801 = vmatprep.subr.mxu0 0.0
    %802 = vmatpush1.msra.mxu0 0.0
    %803 = vmatprep.subr.mxu0 0.0
    %804 = vmatpush1.msra.mxu0 0.0
    %805 = vmatprep.subr.mxu0 0.0
    %806 = vmatpush1.msra.mxu0 0.0
    %807 = vmatprep.mubr.f32.mxu0 0.0
    %808 = vmatmul.mubr.f32.gmra.mrb[0].mxu0 %v630
    %v809 = vpop.f32.mrb[0].mxu0
    %v810 = vadd.f32 %v666, %v809
    %v811 = vpop.f32.mrb[0].mxu0
    %812 = vmatprep.mubr.f32.mxu0 0.0
    %813 = vmatmul.mubr.f32.gmra.mrb[0].mxu0 %v631
    %v814 = vpop.f32.mrb[0].mxu0
    %v815 = vadd.f32 %v671, %v814
    %v816 = vpop.f32.mrb[0].mxu0
    %817 = vmatprep.mubr.f32.mxu0 0.0
    %818 = vmatmul.mubr.f32.gmra.mrb[0].mxu0 %v632
    %v819 = vpop.f32.mrb[0].mxu0
    %v820 = vadd.f32 %v676, %v819
    %v821 = vpop.f32.mrb[0].mxu0
    %822 = vmatprep.mubr.f32.mxu0 0.0
    %823 = vmatmul.mubr.f32.gmra.mrb[0].mxu0 %v633
    %v824 = vpop.f32.mrb[0].mxu0
    %v825 = vadd.f32 %v681, %v824
    %v826 = vpop.f32.mrb[0].mxu0
    %827 = vmatprep.mubr.f32.mxu0 0.0
    %828 = vmatmul.mubr.f32.gmra.mrb[0].mxu0 %v634
    %v829 = vpop.f32.mrb[0].mxu0
    %v830 = vadd.f32 %v686, %v829
    %v831 = vpop.f32.mrb[0].mxu0
    %832 = vmatprep.mubr.f32.mxu0 0.0
    %833 = vmatmul.mubr.f32.gmra.mrb[0].mxu0 %v635
    %v834 = vpop.f32.mrb[0].mxu0
    %v835 = vadd.f32 %v691, %v834
    %v836 = vpop.f32.mrb[0].mxu0
    %837 = vmatprep.mubr.f32.mxu0 0.0
    %838 = vmatmul.mubr.f32.gmra.mrb[0].mxu0 %v636
    %v839 = vpop.f32.mrb[0].mxu0
    %v840 = vadd.f32 %v696, %v839
    %v841 = vpop.f32.mrb[0].mxu0
    %842 = vmatprep.mubr.f32.mxu0 0.0
    %843 = vmatmul.mubr.f32.gmra.mrb[0].mxu0 %v637
    %v844 = vpop.f32.mrb[0].mxu0
    %v845 = vadd.f32 %v701, %v844
    %v846 = vpop.f32.mrb[0].mxu0
    %847 = vmatprep.mubr.f32.mxu0 0.0
    %848 = vmatmul.mubr.f32.gmra.mrb[0].mxu0 %v638
    %v849 = vpop.f32.mrb[0].mxu0
    %v850 = vadd.f32 %v706, %v849
    %v851 = vpop.f32.mrb[0].mxu0
    %852 = vmatprep.mubr.f32.mxu0 0.0
    %853 = vmatmul.mubr.f32.gmra.mrb[0].mxu0 %v639
    %v854 = vpop.f32.mrb[0].mxu0
    %v855 = vadd.f32 %v711, %v854
    %v856 = vpop.f32.mrb[0].mxu0
    %857 = vmatprep.mubr.f32.mxu0 0.0
    %858 = vmatmul.mubr.f32.gmra.mrb[0].mxu0 %v640
    %v859 = vpop.f32.mrb[0].mxu0
    %v860 = vadd.f32 %v716, %v859
    %v861 = vpop.f32.mrb[0].mxu0
    %862 = vmatprep.mubr.f32.mxu0 0.0
    %863 = vmatmul.mubr.f32.gmra.mrb[0].mxu0 %v641
    %v864 = vpop.f32.mrb[0].mxu0
    %v865 = vadd.f32 %v721, %v864
    %v866 = vpop.f32.mrb[0].mxu0
    %867 = vmatprep.mubr.f32.mxu0 0.0
    %868 = vmatmul.mubr.f32.gmra.mrb[0].mxu0 %v642
    %v869 = vpop.f32.mrb[0].mxu0
    %v870 = vadd.f32 %v726, %v869
    %v871 = vpop.f32.mrb[0].mxu0
    %872 = vmatprep.mubr.f32.mxu0 0.0
    %873 = vmatmul.mubr.f32.gmra.mrb[0].mxu0 %v643
    %v874 = vpop.f32.mrb[0].mxu0
    %v875 = vadd.f32 %v731, %v874
    %v876 = vpop.f32.mrb[0].mxu0
    %877 = vmatprep.mubr.f32.mxu0 0.0
    %878 = vmatmul.mubr.f32.gmra.mrb[0].mxu0 %v644
    %v879 = vpop.f32.mrb[0].mxu0
    %v880 = vadd.f32 %v736, %v879
    %v881 = vpop.f32.mrb[0].mxu0
    %882 = vmatprep.mubr.f32.mxu0 0.0
    %883 = vmatmul.mubr.f32.gmra.mrb[0].mxu0 %v645
    %v884 = vpop.f32.mrb[0].mxu0
    %v885 = vadd.f32 %v741, %v884
    %v886 = vpop.f32.mrb[0].mxu0
    %887 = vdwg.mxu0
    %v888 = vmax.f32 %v810, 0.0
    %v889 = vmax.f32 %v815, 0.0
    %v890 = vmax.f32 %v820, 0.0
    %v891 = vmax.f32 %v825, 0.0
    %v892 = vmax.f32 %v830, 0.0
    %v893 = vmax.f32 %v835, 0.0
    %v894 = vmax.f32 %v840, 0.0
    %v895 = vmax.f32 %v845, 0.0
    %v896 = vmax.f32 %v850, 0.0
    %v897 = vmax.f32 %v855, 0.0
    %v898 = vmax.f32 %v860, 0.0
    %v899 = vmax.f32 %v865, 0.0
    %v900 = vmax.f32 %v870, 0.0
    %v901 = vmax.f32 %v875, 0.0
    %v902 = vmax.f32 %v880, 0.0
    %v903 = vmax.f32 %v885, 0.0
    %v904 = vld [vmem:[%s5] sm:$0xff]
    %v905 = vld [vmem:[%s5 + $0x8] sm:$0xff]
    %v906 = vld [vmem:[%s5 + $0x10] sm:$0xff]
    %v907 = vld [vmem:[%s5 + $0x18] sm:$0xff]
    %v908 = vld [vmem:[%s5 + $0x20] sm:$0xff]
    %v909 = vld [vmem:[%s5 + $0x28] sm:$0xff]
    %v910 = vld [vmem:[%s5 + $0x30] sm:$0xff]
    %v911 = vld [vmem:[%s5 + $0x38] sm:$0xff]
    %v912 = vld [vmem:[%s5 + $0x40] sm:$0xff]
    %v913 = vld [vmem:[%s5 + $0x48] sm:$0xff]
    %v914 = vld [vmem:[%s5 + $0x50] sm:$0xff]
    %v915 = vld [vmem:[%s5 + $0x58] sm:$0xff]
    %v916 = vld [vmem:[%s5 + $0x60] sm:$0xff]
    %v917 = vld [vmem:[%s5 + $0x68] sm:$0xff]
    %v918 = vld [vmem:[%s5 + $0x70] sm:$0xff]
    %v919 = vld [vmem:[%s5 + $0x78] sm:$0xff]
    %921 = vset.pattern.permute.xlu0 0
    %922 = vperm.xlu0 %921, %v904
    %v923 = vpop.permute.xlu0 %922
    %926 = vset.pattern.permute.xlu0 0
    %927 = vperm.xlu0 %926, %v905
    %v928 = vpop.permute.xlu0 %927
    %931 = vset.pattern.permute.xlu0 0
    %932 = vperm.xlu0 %931, %v906
    %v933 = vpop.permute.xlu0 %932
    %936 = vset.pattern.permute.xlu0 0
    %937 = vperm.xlu0 %936, %v907
    %v938 = vpop.permute.xlu0 %937
    %941 = vset.pattern.permute.xlu0 0
    %942 = vperm.xlu0 %941, %v908
    %v943 = vpop.permute.xlu0 %942
    %946 = vset.pattern.permute.xlu0 0
    %947 = vperm.xlu0 %946, %v909
    %v948 = vpop.permute.xlu0 %947
    %951 = vset.pattern.permute.xlu0 0
    %952 = vperm.xlu0 %951, %v910
    %v953 = vpop.permute.xlu0 %952
    %956 = vset.pattern.permute.xlu0 0
    %957 = vperm.xlu0 %956, %v911
    %v958 = vpop.permute.xlu0 %957
    %961 = vset.pattern.permute.xlu0 0
    %962 = vperm.xlu0 %961, %v912
    %v963 = vpop.permute.xlu0 %962
    %966 = vset.pattern.permute.xlu0 0
    %967 = vperm.xlu0 %966, %v913
    %v968 = vpop.permute.xlu0 %967
    %971 = vset.pattern.permute.xlu0 0
    %972 = vperm.xlu0 %971, %v914
    %v973 = vpop.permute.xlu0 %972
    %976 = vset.pattern.permute.xlu0 0
    %977 = vperm.xlu0 %976, %v915
    %v978 = vpop.permute.xlu0 %977
    %981 = vset.pattern.permute.xlu0 0
    %982 = vperm.xlu0 %981, %v916
    %v983 = vpop.permute.xlu0 %982
    %986 = vset.pattern.permute.xlu0 0
    %987 = vperm.xlu0 %986, %v917
    %v988 = vpop.permute.xlu0 %987
    %991 = vset.pattern.permute.xlu0 0
    %992 = vperm.xlu0 %991, %v918
    %v993 = vpop.permute.xlu0 %992
    %996 = vset.pattern.permute.xlu0 0
    %997 = vperm.xlu0 %996, %v919
    %v998 = vpop.permute.xlu0 %997
    %v1000 = vmul.f32 %v888, %v923
    %v1001 = vmul.f32 %v889, %v928
    %v1002 = vmul.f32 %v890, %v933
    %v1003 = vmul.f32 %v891, %v938
    %v1004 = vmul.f32 %v892, %v943
    %v1005 = vmul.f32 %v893, %v948
    %v1006 = vmul.f32 %v894, %v953
    %v1007 = vmul.f32 %v895, %v958
    %v1008 = vmul.f32 %v896, %v963
    %v1009 = vmul.f32 %v897, %v968
    %v1010 = vmul.f32 %v898, %v973
    %v1011 = vmul.f32 %v899, %v978
    %v1012 = vmul.f32 %v900, %v983
    %v1013 = vmul.f32 %v901, %v988
    %v1014 = vmul.f32 %v902, %v993
    %v1015 = vmul.f32 %v903, %v998
    %v1016 = vadd.f32 %v1000, %v1001
    %v1017 = vadd.f32 %v1016, %v1002
    %v1018 = vadd.f32 %v1017, %v1003
    %v1019 = vadd.f32 %v1018, %v1004
    %v1020 = vadd.f32 %v1019, %v1005
    %v1021 = vadd.f32 %v1020, %v1006
    %v1022 = vadd.f32 %v1021, %v1007
    %v1023 = vadd.f32 %v1022, %v1008
    %v1024 = vadd.f32 %v1023, %v1009
    %v1025 = vadd.f32 %v1024, %v1010
    %v1026 = vadd.f32 %v1025, %v1011
    %v1027 = vadd.f32 %v1026, %v1012
    %v1028 = vadd.f32 %v1027, %v1013
    %v1029 = vadd.f32 %v1028, %v1014
    %v1030 = vadd.f32 %v1029, %v1015
    %v1031 = vrot.slane %v1030, 4
    %v1032 = vadd.f32 %v1030, %v1031
    %v1033 = vrot.slane %v1032, 2
    %v1034 = vadd.f32 %v1032, %v1033
    %v1035 = vrot.slane %v1034, 1
    %v1036 = vadd.f32 %v1034, %v1035
    %v1037 = vld [vmem:[#allocation2] sm:$0x1]
    %1039 = vset.pattern.permute.xlu0 0
    %1040 = vperm.xlu0 %1039, %v1037
    %v1041 = vpop.permute.xlu0 %1040
    %v1043 = vlaneseq
    %v1044 = vshrl.u32 %v1043, 7
    %v1045 = vsub.s32 0, %v1044
    %v1046 = vrot.slane %v1041, %v1045
    %v1047 = vadd.f32 %v1036, %v1046
    %1048 = vst [vmem:[#allocation3] sm:$0x1] %v1047
    // Predicated region
    $region30: #{tpu_custom_call.1} parent=1 // pred_check
      _
    $region31: #{tpu_custom_call.1} parent=1 // pred_check_branch
      %1050 = sbr.rel (0) target = $region33
    $region32: #{tpu_custom_call.1} parent=1 // pred_region
      %s1052 = ssub.s32 16, 16
      %1053 = vsyncadd [#allocation4], %s1052
      %s1055 = sshll.u32 [#allocation3], 4
      %s1056 = int_to_ptr.vmem [resolvable:$true] %s1055
      %1058 = dma.vmem_to_hbm [thread:$0]  %s1056, 16, %s7, [#allocation4]
    $region33: #{tpu_custom_call.1} parent=1 // pred_fallthru
      _
    // Predicated region
    $region34: #{tpu_custom_call.1} parent=1 // pred_check
      _
    $region35: #{tpu_custom_call.1} parent=1 // pred_check_branch
      %1060 = sbr.rel (0) target = $region37
    $region36: #{tpu_custom_call.1} parent=1 // pred_region
      %1061 = dma.done [#allocation4], 16
    $region37: #{tpu_custom_call.1} parent=1 // pred_fallthru
      _
    %1062 = vsyncpa [#allocation4], 1

</llo_original>
